<compile_context>
chip_gen: v7x
topology: tpu7x:2x2x1
jax: 0.10.0
libtpu: 0.0.40
codegen_flags: <defaults>
</compile_context>

<pallas_src>
import jax
import jax.numpy as jnp
from jax.experimental import pallas as pl
from jax.experimental.pallas import tpu as pltpu

LANE = 128       # TPU vreg lane width
SUBLANE = 8      # TPU vreg sublane count (f32)


def _round_up(n, m):
    return ((n + m - 1) // m) * m


def _ddp_mlp_kernel(x_ref, w1_ref, b1_ref, w2_ref, b2_ref, o_ref):
    # Hot path of DDP.forward == wrapped module forward: fused Linear-ReLU-Linear.
    x = x_ref[...].astype(jnp.bfloat16)                    # (tile_b, 32) cast in-kernel
    # Linear 1: W1 pre-transposed to (in, hid_pad) -> (tile_b, 128), f32 MXU acc.
    h = jnp.dot(x, w1_ref[...], preferred_element_type=jnp.float32)
    h = jnp.maximum(h + b1_ref[...], 0.0)                  # f32 VPU bias + ReLU
    # Linear 2: (tile_b, 128) @ (128, 16) -> compact real output columns.
    y = jnp.dot(h.astype(jnp.bfloat16), w2_ref[...],
                preferred_element_type=jnp.float32)
    o_ref[...] = (y + b2_ref[...]).astype(o_ref.dtype)     # compact (tile_b, 16) store


def init_ddp_params(key, in_features=32, hidden=64, out_features=16,
                    dtype=jnp.float32):
    """PyTorch nn.Linear-style init; emulates dist.broadcast(state_dict, 0).

    With a single synthetic process, broadcast-from-rank-0 is the identity:
    every replica holds exactly these tensors.
    """
    k1, k2, k3, k4 = jax.random.split(key, 4)
    lim1 = 1.0 / jnp.sqrt(jnp.asarray(in_features, dtype))
    lim2 = 1.0 / jnp.sqrt(jnp.asarray(hidden, dtype))
    w1 = jax.random.uniform(k1, (hidden, in_features), dtype, -lim1, lim1)
    b1 = jax.random.uniform(k2, (hidden,), dtype, -lim1, lim1)
    w2 = jax.random.uniform(k3, (out_features, hidden), dtype, -lim2, lim2)
    b2 = jax.random.uniform(k4, (out_features,), dtype, -lim2, lim2)
    # TODO(synk): Reducer bucketed gradient all-reduce is backward-only; no
    # forward-pass Pallas equivalent (would use pltpu.make_async_remote_copy).
    return (w1, b1, w2, b2)


def pack_params_for_tpu(params):
    """One-time layout plumbing: pre-transpose weights to (in, out), pad only the
    cheap hidden dim to 128 lanes, cast matmul operands to bf16 (biases f32).

    Input (K=32) and output (N=16) dims are kept at their real sizes so the
    batch-scaled HBM streams carry no padding."""
    w1, b1, w2, b2 = params
    hid, in_f = w1.shape
    out_f = w2.shape[0]
    hid_p = _round_up(hid, LANE)

    w1_p = jnp.zeros((in_f, hid_p), jnp.bfloat16).at[:, :hid].set(
        w1.T.astype(jnp.bfloat16))
    # Padded hidden cols are exactly zero (weights + bias) so ReLU keeps them 0
    # and the zero rows of W2 contribute nothing -> no leakage into real outputs.
    b1_p = jnp.zeros((1, hid_p), jnp.float32).at[0, :hid].set(b1.astype(jnp.float32))
    w2_p = jnp.zeros((hid_p, out_f), jnp.bfloat16).at[:hid, :].set(
        w2.T.astype(jnp.bfloat16))
    b2_p = b2.astype(jnp.float32).reshape(1, out_f)
    return (w1_p, b1_p, w2_p, b2_p)


def ddp_forward(x, packed_params, *, tile_b=4096):
    """DDP forward: reducer.reset_state() is compute-free; run module forward."""
    w1, b1, w2, b2 = packed_params
    B, in_f = x.shape
    hid_p = w1.shape[1]
    out_f = w2.shape[1]

    # Pad batch only to the sublane multiple (8); remainder tiles handled by grid.
    b_pad = _round_up(B, SUBLANE)
    if b_pad != B:
        x = jnp.pad(x, ((0, b_pad - B), (0, 0)))

    # Large batch tiles (per-step overhead amortization), shrunk to the problem;
    # keep >=2 grid steps when possible so v7x's 2 TensorCores both get work.
    tile_b = min(tile_b, b_pad)
    if b_pad >= 2 * SUBLANE:
        tile_b = min(tile_b, _round_up(pl.cdiv(b_pad, 2), SUBLANE))
    tile_b = max(tile_b, SUBLANE)
    grid = (pl.cdiv(b_pad, tile_b),)

    # Real (unpadded) flops; bytes reflect the compact input/output streams.
    hid_real = int(jnp.sum(jnp.any(w2 != 0, axis=1))) if False else w1.shape[1]
    flops = 2 * B * (in_f * hid_p + hid_p * out_f)
    bytes_accessed = (b_pad * in_f * 4                       # x (f32, real K)
                      + (in_f * hid_p + hid_p * out_f) * 2   # weights (bf16)
                      + (hid_p + out_f) * 4                  # biases (f32)
                      + b_pad * out_f * 4)                   # out (f32, real N)

    out = pl.pallas_call(
        _ddp_mlp_kernel,
        out_shape=jax.ShapeDtypeStruct((b_pad, out_f), x.dtype),
        grid=grid,
        in_specs=[
            pl.BlockSpec((tile_b, in_f), lambda i: (i, 0)),   # x tile, real K=32
            pl.BlockSpec((in_f, hid_p), lambda i: (0, 0)),    # W1, VMEM-resident
            pl.BlockSpec((1, hid_p), lambda i: (0, 0)),       # b1, VMEM-resident
            pl.BlockSpec((hid_p, out_f), lambda i: (0, 0)),   # W2, VMEM-resident
            pl.BlockSpec((1, out_f), lambda i: (0, 0)),       # b2, VMEM-resident
        ],
        out_specs=pl.BlockSpec((tile_b, out_f), lambda i: (i, 0)),  # compact out
        compiler_params=pltpu.CompilerParams(
            dimension_semantics=("parallel",),   # batch axis across v7x's 2 TCs
            vmem_limit_bytes=32 * 1024 * 1024),  # actual footprint is a few MiB
        cost_estimate=pl.CostEstimate(
            flops=flops, transcendentals=0, bytes_accessed=bytes_accessed),
    )(x, w1, b1, w2, b2)

    # Only the (rare) sublane batch padding needs slicing back; columns already real.
    if b_pad != B:
        out = out[:B]
    return out


def reference_forward(x, params):
    w1, b1, w2, b2 = params
    h = jnp.maximum(x @ w1.T + b1, 0.0)
    return h @ w2.T + b2


if __name__ == "__main__":
    key = jax.random.PRNGKey(0)
    kx, kp = jax.random.split(key)

    B, IN, HID, OUT = 8, 32, 64, 16
    x = jax.random.normal(kx, (B, IN), jnp.float32)
    params = init_ddp_params(kp, IN, HID, OUT)
    packed = pack_params_for_tpu(params)

    out = ddp_forward(x, packed)
    out = jax.block_until_ready(out)

    ref = reference_forward(x, params)
    assert out.shape == (B, OUT), out.shape
    # bf16 matmul operands with f32 accumulation -> loosen tolerance vs f32 ref.
    assert jnp.allclose(out, ref, atol=5e-2, rtol=5e-2), "mismatch vs reference"

    print("KERNEL_OK")
</pallas_src>

<mosaic_0001>
module attributes {stable_mosaic.version = 11 : i64} {
  func.func @_ddp_mlp_kernel(%arg0: i32, %arg1: memref<8x32xf32, #tpu.memory_space<vmem>>, %arg2: memref<32x128xbf16, #tpu.memory_space<vmem>>, %arg3: memref<1x128xf32, #tpu.memory_space<vmem>>, %arg4: memref<128x16xbf16, #tpu.memory_space<vmem>>, %arg5: memref<1x16xf32, #tpu.memory_space<vmem>>, %arg6: memref<8x16xf32, #tpu.memory_space<vmem>>) attributes {dimension_semantics = [#tpu.dimension_semantics<parallel>], iteration_bounds = array<i64: 1>, scalar_prefetch = 0 : i64, scratch_operands = 0 : i64, tpu.core_type = #tpu.core_type<tc>, window_params = [{transform_indices = @transform_0, window_bounds = array<i64: 8, 32>}, {pipeline_mode = #tpu.pipeline_mode<synchronous>, transform_indices = @transform_1, window_bounds = array<i64: 32, 128>}, {pipeline_mode = #tpu.pipeline_mode<synchronous>, transform_indices = @transform_2, window_bounds = array<i64: 1, 128>}, {pipeline_mode = #tpu.pipeline_mode<synchronous>, transform_indices = @transform_3, window_bounds = array<i64: 128, 16>}, {pipeline_mode = #tpu.pipeline_mode<synchronous>, transform_indices = @transform_4, window_bounds = array<i64: 1, 16>}, {transform_indices = @transform_5, window_bounds = array<i64: 8, 16>}]} {
    %c0 = arith.constant 0 : index
    %c0_0 = arith.constant 0 : index
    %0 = vector.load %arg1[%c0, %c0_0] : memref<8x32xf32, #tpu.memory_space<vmem>>, vector<8x32xf32>
    %1 = arith.truncf %0 : vector<8x32xf32> to vector<8x32xbf16>
    %c0_1 = arith.constant 0 : index
    %c0_2 = arith.constant 0 : index
    %2 = vector.load %arg2[%c0_1, %c0_2] : memref<32x128xbf16, #tpu.memory_space<vmem>>, vector<32x128xbf16>
    %cst = arith.constant dense<0.000000e+00> : vector<8x128xf32>
    %3 = tpu.matmul %1, %2, %cst {dimension_numbers = #tpu.dot_dimension_numbers<[1], [0], [0], [1], [0, 0, 1, 1], [], []>} : vector<8x32xbf16>, vector<32x128xbf16>, vector<8x128xf32> -> vector<8x128xf32>
    %c0_3 = arith.constant 0 : index
    %c0_4 = arith.constant 0 : index
    %4 = vector.load %arg3[%c0_3, %c0_4] : memref<1x128xf32, #tpu.memory_space<vmem>>, vector<1x128xf32>
    %5 = vector.broadcast %4 : vector<1x128xf32> to vector<8x128xf32>
    %6 = arith.addf %3, %5 : vector<8x128xf32>
    %cst_5 = arith.constant 0.000000e+00 : f32
    %7 = vector.broadcast %cst_5 : f32 to vector<8x128xf32>
    %8 = arith.maximumf %6, %7 : vector<8x128xf32>
    %9 = arith.truncf %8 : vector<8x128xf32> to vector<8x128xbf16>
    %c0_6 = arith.constant 0 : index
    %c0_7 = arith.constant 0 : index
    %10 = vector.load %arg4[%c0_6, %c0_7] : memref<128x16xbf16, #tpu.memory_space<vmem>>, vector<128x16xbf16>
    %cst_8 = arith.constant dense<0.000000e+00> : vector<8x16xf32>
    %11 = tpu.matmul %9, %10, %cst_8 {dimension_numbers = #tpu.dot_dimension_numbers<[1], [0], [0], [1], [0, 0, 1, 1], [], []>} : vector<8x128xbf16>, vector<128x16xbf16>, vector<8x16xf32> -> vector<8x16xf32>
    %c0_9 = arith.constant 0 : index
    %c0_10 = arith.constant 0 : index
    %12 = vector.load %arg5[%c0_9, %c0_10] : memref<1x16xf32, #tpu.memory_space<vmem>>, vector<1x16xf32>
    %13 = vector.broadcast %12 : vector<1x16xf32> to vector<8x16xf32>
    %14 = arith.addf %11, %13 : vector<8x16xf32>
    %c0_11 = arith.constant 0 : index
    %c0_12 = arith.constant 0 : index
    %15 = vector.load %arg6[%c0_11, %c0_12] : memref<8x16xf32, #tpu.memory_space<vmem>>, vector<8x16xf32>
    tpu.vector_store %arg6[%c0_11, %c0_12], %14 {strides = array<i32>} : memref<8x16xf32, #tpu.memory_space<vmem>>, vector<8x16xf32>,
    return
  }
  func.func @transform_0(%arg0: i32) -> (i32, i32) {
    %c0_i32 = arith.constant 0 : i32
    %c0_i32_0 = arith.constant 0 : i32
    return %arg0, %c0_i32 : i32, i32
  }
  func.func @transform_1(%arg0: i32) -> (i32, i32) {
    %c0_i32 = arith.constant 0 : i32
    %c0_i32_0 = arith.constant 0 : i32
    %c0_i32_1 = arith.constant 0 : i32
    return %c0_i32, %c0_i32_0 : i32, i32
  }
  func.func @transform_2(%arg0: i32) -> (i32, i32) {
    %c0_i32 = arith.constant 0 : i32
    %c0_i32_0 = arith.constant 0 : i32
    %c0_i32_1 = arith.constant 0 : i32
    return %c0_i32, %c0_i32_0 : i32, i32
  }
  func.func @transform_3(%arg0: i32) -> (i32, i32) {
    %c0_i32 = arith.constant 0 : i32
    %c0_i32_0 = arith.constant 0 : i32
    %c0_i32_1 = arith.constant 0 : i32
    return %c0_i32, %c0_i32_0 : i32, i32
  }
  func.func @transform_4(%arg0: i32) -> (i32, i32) {
    %c0_i32 = arith.constant 0 : i32
    %c0_i32_0 = arith.constant 0 : i32
    %c0_i32_1 = arith.constant 0 : i32
    return %c0_i32, %c0_i32_0 : i32, i32
  }
  func.func @transform_5(%arg0: i32) -> (i32, i32) {
    %c0_i32 = arith.constant 0 : i32
    %c0_i32_0 = arith.constant 0 : i32
    return %arg0, %c0_i32 : i32, i32
  }
}

</mosaic_0001>

<llo_original>
// kernel: tpu_custom_call.1
$region0: #{tpu_custom_call.1}
  #allocation0 [shape = 'u32[]', space=smem, size = 0x4, offset = 0x4, fixed_abs, tag = 'smem constant byte address 0x4 - core index']
  #allocation1 [shape = 'u32[144,128]{1,0:T(1,128)}', space=vmem, size = 0x12000, scoped, tag = 'internal scratch']
  %s0 = inlined_call_operand.vmem [shape: f32[8,32], index: 0, kind: input, shape index: {}]
  %s1 = inlined_call_operand.vmem [shape: bf16[32,128], index: 1, kind: input, shape index: {}]
  %s2 = inlined_call_operand.vmem [shape: f32[1,128], index: 2, kind: input, shape index: {}]
  %s3 = inlined_call_operand.vmem [shape: bf16[128,16], index: 3, kind: input, shape index: {}]
  %s4 = inlined_call_operand.vmem [shape: f32[1,16], index: 4, kind: input, shape index: {}]
  %s5 = inlined_call_operand.hbm [shape: f32[8,16], index: 5, kind: output, shape index: {}]
  %s6 = sld [smem:[#allocation0]]
  $region30: #{tpu_custom_call.1} parent=0
    _
  %s8 = ssub.s32 1, %s6
  %s9 = scalar_select 0, %s8, %s6
  $region1: #{tpu_custom_call.1} parent=0
    #allocation2 [shape = 'u8[4096]{0}', space=vmem, size = 0x1000, scoped, tag = 'output window, operand 0, single buffered']
    #allocation3 [shape = 's32[1]{0}', space=sflag, size = 0x4, scoped, tag = 'scoped memory for tpu_custom_call.1']
    %10 = vsyncpa [#allocation3], 0
    // Predicated region
    $region2: #{tpu_custom_call.1} parent=1 // pred_check
      _
    $region3: #{tpu_custom_call.1} parent=1 // pred_check_branch
      %12 = sbr.rel (0) target = $region5
    $region4: #{tpu_custom_call.1} parent=1 // pred_region
      _
    $region5: #{tpu_custom_call.1} parent=1 // pred_fallthru
      _
    // Predicated region
    $region6: #{tpu_custom_call.1} parent=1 // pred_check
      _
    $region7: #{tpu_custom_call.1} parent=1 // pred_check_branch
      %14 = sbr.rel (0) target = $region9
    $region8: #{tpu_custom_call.1} parent=1 // pred_region
      _
    $region9: #{tpu_custom_call.1} parent=1 // pred_fallthru
      _
    // Predicated region
    $region10: #{tpu_custom_call.1} parent=1 // pred_check
      _
    $region11: #{tpu_custom_call.1} parent=1 // pred_check_branch
      %16 = sbr.rel (0) target = $region13
    $region12: #{tpu_custom_call.1} parent=1 // pred_region
      _
    $region13: #{tpu_custom_call.1} parent=1 // pred_fallthru
      _
    // Predicated region
    $region14: #{tpu_custom_call.1} parent=1 // pred_check
      _
    $region15: #{tpu_custom_call.1} parent=1 // pred_check_branch
      %18 = sbr.rel (0) target = $region17
    $region16: #{tpu_custom_call.1} parent=1 // pred_region
      _
    $region17: #{tpu_custom_call.1} parent=1 // pred_fallthru
      _
    // Predicated region
    $region18: #{tpu_custom_call.1} parent=1 // pred_check
      _
    $region19: #{tpu_custom_call.1} parent=1 // pred_check_branch
      %20 = sbr.rel (0) target = $region21
    $region20: #{tpu_custom_call.1} parent=1 // pred_region
      _
    $region21: #{tpu_custom_call.1} parent=1 // pred_fallthru
      _
    %v22 = vld [vmem:[%s0] sm:$0xff]
    %v23 = vpack.c.bf16 %v22, %v22
    %v24 = vld [vmem:[%s1] sm:$0xf]
    %v25 = vld [vmem:[%s1 + $0x4] sm:$0xf]
    %v26 = vld [vmem:[%s1 + $0x8] sm:$0xf]
    %v27 = vld [vmem:[%s1 + $0xc] sm:$0xf]
    %v28 = vld [vmem:[%s2] sm:$0x1]
    %v30 = vlaneseq
    %v31 = vshrl.u32 %v30, 7
    %v32 = vsub.s32 0, %v31
    %v33 = vrot.slane %v28, %v32
    %v39 = vunpack.c.l.b16 %v24
    %v40 = vunpack.c.l.b16 %v25
    %v41 = vunpack.c.l.b16 %v26
    %v42 = vunpack.c.l.b16 %v27
    %v43 = vpack.c.b16 %v40, %v39
    %v44 = vpack.c.b16 %v42, %v41
    %vm47 = vcmask 261120
    %v49 = vsel %vm47, %v23, 0
    %51 = vmatprep.subr.bf16.mxu0 0
    %52 = vmatpush1.bf16.msra.mxu0 %v43
    %53 = vmatprep.subr.bf16.mxu0 0
    %54 = vmatpush1.bf16.msra.mxu0 %v44
    %55 = vmatprep.subr.bf16.mxu0 0
    %56 = vmatpush1.bf16.msra.mxu0 0
    %57 = vmatprep.subr.bf16.mxu0 0
    %58 = vmatpush1.bf16.msra.mxu0 0
    %59 = vmatprep.subr.bf16.mxu0 0
    %60 = vmatpush1.bf16.msra.mxu0 0
    %61 = vmatprep.subr.bf16.mxu0 0
    %62 = vmatpush1.bf16.msra.mxu0 0
    %63 = vmatprep.subr.bf16.mxu0 0
    %64 = vmatpush1.bf16.msra.mxu0 0
    %65 = vmatprep.subr.bf16.mxu0 0
    %66 = vmatpush1.bf16.msra.mxu0 0
    %67 = vmatprep.subr.bf16.mxu0 0
    %68 = vmatpush1.bf16.msra.mxu0 0
    %69 = vmatprep.subr.bf16.mxu0 0
    %70 = vmatpush1.bf16.msra.mxu0 0
    %71 = vmatprep.subr.bf16.mxu0 0
    %72 = vmatpush1.bf16.msra.mxu0 0
    %73 = vmatprep.subr.bf16.mxu0 0
    %74 = vmatpush1.bf16.msra.mxu0 0
    %75 = vmatprep.subr.bf16.mxu0 0
    %76 = vmatpush1.bf16.msra.mxu0 0
    %77 = vmatprep.subr.bf16.mxu0 0
    %78 = vmatpush1.bf16.msra.mxu0 0
    %79 = vmatprep.subr.bf16.mxu0 0
    %80 = vmatpush1.bf16.msra.mxu0 0
    %81 = vmatprep.subr.bf16.mxu0 0
    %82 = vmatpush1.bf16.msra.mxu0 0
    %83 = vmatprep.mubr.bf16.mxu0 0
    %84 = vmatmul.mubr.bf16.gmra.mrb[0].mxu0 %v49
    %v85 = vpop.f32.mrb[0].mxu0
    %v86 = vadd.f32 %v33, %v85
    %v87 = vpop.f32.mrb[0].mxu0
    %v88 = vpop.f32.mrb[0].mxu0
    %v89 = vpop.f32.mrb[0].mxu0
    %90 = vdwg.mxu0
    %v91 = vmax.f32 %v86, 0.0
    %v92 = vpack.c.bf16 %v91, %v91
    %v93 = vld [vmem:[%s3] sm:$0xf]
    %v94 = vld [vmem:[%s3 + $0x4] sm:$0xf]
    %v95 = vld [vmem:[%s3 + $0x8] sm:$0xf]
    %v96 = vld [vmem:[%s3 + $0xc] sm:$0xf]
    %v97 = vld [vmem:[%s3 + $0x10] sm:$0xf]
    %v98 = vld [vmem:[%s3 + $0x14] sm:$0xf]
    %v99 = vld [vmem:[%s3 + $0x18] sm:$0xf]
    %v100 = vld [vmem:[%s3 + $0x1c] sm:$0xf]
    %v101 = vld [vmem:[%s3 + $0x20] sm:$0xf]
    %v102 = vld [vmem:[%s3 + $0x24] sm:$0xf]
    %v103 = vld [vmem:[%s3 + $0x28] sm:$0xf]
    %v104 = vld [vmem:[%s3 + $0x2c] sm:$0xf]
    %v105 = vld [vmem:[%s3 + $0x30] sm:$0xf]
    %v106 = vld [vmem:[%s3 + $0x34] sm:$0xf]
    %v107 = vld [vmem:[%s3 + $0x38] sm:$0xf]
    %v108 = vld [vmem:[%s3 + $0x3c] sm:$0xf]
    %v109 = vld [vmem:[%s4] sm:$0x1]
    %v111 = vlaneseq
    %v112 = vshrl.u32 %v111, 7
    %v113 = vsub.s32 0, %v112
    %v114 = vrot.slane %v109, %v113
    %v132 = vunpack.c.l.b16 %v93
    %v133 = vunpack.c.l.b16 %v94
    %v134 = vunpack.c.l.b16 %v95
    %v135 = vunpack.c.l.b16 %v96
    %v136 = vunpack.c.l.b16 %v97
    %v137 = vunpack.c.l.b16 %v98
    %v138 = vunpack.c.l.b16 %v99
    %v139 = vunpack.c.l.b16 %v100
    %v140 = vunpack.c.l.b16 %v101
    %v141 = vunpack.c.l.b16 %v102
    %v142 = vunpack.c.l.b16 %v103
    %v143 = vunpack.c.l.b16 %v104
    %v144 = vunpack.c.l.b16 %v105
    %v145 = vunpack.c.l.b16 %v106
    %v146 = vunpack.c.l.b16 %v107
    %v147 = vunpack.c.l.b16 %v108
    %v148 = vpack.c.b16 %v133, %v132
    %v149 = vpack.c.b16 %v135, %v134
    %v150 = vpack.c.b16 %v137, %v136
    %v151 = vpack.c.b16 %v139, %v138
    %v152 = vpack.c.b16 %v141, %v140
    %v153 = vpack.c.b16 %v143, %v142
    %v154 = vpack.c.b16 %v145, %v144
    %v155 = vpack.c.b16 %v147, %v146
    %164 = vmatprep.subr.bf16.mxu0 0
    %165 = vmatpush1.bf16.msra.mxu0 %v148
    %166 = vmatprep.subr.bf16.mxu0 0
    %167 = vmatpush1.bf16.msra.mxu0 %v149
    %168 = vmatprep.subr.bf16.mxu0 0
    %169 = vmatpush1.bf16.msra.mxu0 %v150
    %170 = vmatprep.subr.bf16.mxu0 0
    %171 = vmatpush1.bf16.msra.mxu0 %v151
    %172 = vmatprep.subr.bf16.mxu0 0
    %173 = vmatpush1.bf16.msra.mxu0 %v152
    %174 = vmatprep.subr.bf16.mxu0 0
    %175 = vmatpush1.bf16.msra.mxu0 %v153
    %176 = vmatprep.subr.bf16.mxu0 0
    %177 = vmatpush1.bf16.msra.mxu0 %v154
    %178 = vmatprep.subr.bf16.mxu0 0
    %179 = vmatpush1.bf16.msra.mxu0 %v155
    %180 = vmatprep.subr.bf16.mxu0 0
    %181 = vmatpush1.bf16.msra.mxu0 0
    %182 = vmatprep.subr.bf16.mxu0 0
    %183 = vmatpush1.bf16.msra.mxu0 0
    %184 = vmatprep.subr.bf16.mxu0 0
    %185 = vmatpush1.bf16.msra.mxu0 0
    %186 = vmatprep.subr.bf16.mxu0 0
    %187 = vmatpush1.bf16.msra.mxu0 0
    %188 = vmatprep.subr.bf16.mxu0 0
    %189 = vmatpush1.bf16.msra.mxu0 0
    %190 = vmatprep.subr.bf16.mxu0 0
    %191 = vmatpush1.bf16.msra.mxu0 0
    %192 = vmatprep.subr.bf16.mxu0 0
    %193 = vmatpush1.bf16.msra.mxu0 0
    %194 = vmatprep.subr.bf16.mxu0 0
    %195 = vmatpush1.bf16.msra.mxu0 0
    %196 = vmatprep.mubr.bf16.mxu0 0
    %197 = vmatmul.mubr.bf16.gmra.mrb[0].mxu0 %v92
    %v198 = vpop.f32.mrb[0].mxu0
    %v199 = vadd.f32 %v114, %v198
    %v200 = vpop.f32.mrb[0].mxu0
    %v201 = vpop.f32.mrb[0].mxu0
    %v202 = vpop.f32.mrb[0].mxu0
    %203 = vdwg.mxu0
    %vm204 = vcmask 130048
    %205 = vst.msk [vmem:[#allocation2] sm:$0xff] %vm204, %v199
    // Predicated region
    $region22: #{tpu_custom_call.1} parent=1 // pred_check
      _
    $region23: #{tpu_custom_call.1} parent=1 // pred_check_branch
      %207 = sbr.rel (0) target = $region25
    $region24: #{tpu_custom_call.1} parent=1 // pred_region
      %s209 = ssub.s32 128, 128
      %210 = vsyncadd [#allocation3], %s209
      %s212 = sshll.u32 [#allocation2], 4
      %s213 = int_to_ptr.vmem [resolvable:$true] %s212
      %215 = dma.vmem_to_hbm [thread:$0]  %s213, 128, %s5, [#allocation3]
    $region25: #{tpu_custom_call.1} parent=1 // pred_fallthru
      _
    // Predicated region
    $region26: #{tpu_custom_call.1} parent=1 // pred_check
      _
    $region27: #{tpu_custom_call.1} parent=1 // pred_check_branch
      %217 = sbr.rel (0) target = $region29
    $region28: #{tpu_custom_call.1} parent=1 // pred_region
      %218 = dma.done [#allocation3], 128
    $region29: #{tpu_custom_call.1} parent=1 // pred_fallthru
      _
    %219 = vsyncpa [#allocation3], 1

</llo_original>
